<compile_context>
chip_gen: v7x
topology: tpu7x:2x2x1
jax: 0.10.0
libtpu: 0.0.40
codegen_flags: <defaults>
</compile_context>

<pallas_src>
import functools

import jax
import jax.numpy as jnp
from jax.experimental import pallas as pl
from jax.experimental.pallas import tpu as pltpu


def _round_up(x, m):
    return ((x + m - 1) // m) * m


def _pick_tile(n_padded, target):
    """Largest multiple of 128 <= target that divides n_padded (n_padded % 128 == 0)."""
    t = max(128, min(target, n_padded))
    t = (t // 128) * 128
    while n_padded % t:
        t -= 128
    return t


def _vmem_budget_bytes():
    """Half of this generation's VMEM capacity (fallback: 64 MiB physical / v7x)."""
    try:
        cap = int(pltpu.get_tpu_info().vmem_capacity_bytes)
    except Exception:  # pragma: no cover - conservative fallback off-TPU / old jax
        cap = 64 * 1024 * 1024
    return cap // 2


def _choose_tiles(n_p, c_in, c_out_p, stream_itemsize, vmem_budget,
                  tm_target=None, tk_target=None):
    """Pick (tm, tk): big tiles to amortize grid-step overhead, >=2 row tiles
    when possible (v7x megacore), bounded by the VMEM budget."""
    tm_target = 1024 if tm_target is None else tm_target
    tk_target = 2048 if tk_target is None else tk_target

    # Guarantee at least two row tiles whenever the graph allows it so the
    # "parallel" grid axis feeds both TensorCores on v7x.
    tm_cap = n_p // 2 if n_p >= 256 else n_p
    tm = _pick_tile(n_p, min(tm_target, tm_cap))
    tk = _pick_tile(n_p, min(tk_target, n_p))

    def working_set(tm_, tk_):
        a = 2 * tm_ * tk_ * stream_itemsize        # A double buffer
        x = 2 * n_p * c_in * stream_itemsize       # X resident (allow 2 bufs)
        w = 2 * c_in * c_out_p * 4                 # W resident
        o = 2 * tm_ * c_out_p * 4                  # output double buffer
        acc = tm_ * c_in * 4                       # f32 accumulator scratch
        return a + x + w + o + acc

    budget = int(0.75 * vmem_budget)
    while working_set(tm, tk) > budget and tk > 128:
        tk = _pick_tile(n_p, tk - 128)
    while working_set(tm, tk) > budget and tm > 128:
        tm = _pick_tile(n_p, tm - 128)
    return tm, tk


def _gcn_kernel(a_ref, x_ref, w_ref, o_ref, acc_ref, *, tk):
    """One (row-tile, k-tile) grid step of relu((A_hat @ X) @ W).

    a_ref: (tm, tk) bf16 tile of A_hat (streamed).
    x_ref: (n_p, c_in) resident X; the k-th (tk, c_in) slab is sliced here.
    w_ref: (c_in, c_out_p) resident f32 weights.
    acc_ref: (tm, c_in) f32 accumulator for A_hat @ X.
    """
    k = pl.program_id(1)

    @pl.when(k == 0)
    def _():
        acc_ref[...] = jnp.zeros_like(acc_ref)

    start = pl.multiple_of(k * tk, 128)
    x_slab = x_ref[pl.ds(start, tk), :]
    acc_ref[...] += jnp.dot(
        a_ref[...], x_slab, preferred_element_type=jnp.float32
    )

    @pl.when(k == pl.num_programs(1) - 1)
    def _():
        out = jnp.dot(acc_ref[...], w_ref[...], preferred_element_type=jnp.float32)
        o_ref[...] = jnp.maximum(out, 0.0).astype(o_ref.dtype)


@functools.partial(jax.jit, static_argnames=("tm", "tk", "vmem_limit_bytes"))
def gcn_kipf_forward(a_stream, x, w, *, tm, tk, vmem_limit_bytes):
    """Fused relu(A_hat @ X @ W). `a_stream` is pre-padded + pre-cast at init."""
    n_p = a_stream.shape[0]
    n, c_in = x.shape
    c_out = w.shape[1]
    c_out_p = _round_up(c_out, 128)

    # X / W are tiny: per-call pad/cast is negligible (A_hat is NOT re-touched).
    x_p = x.astype(a_stream.dtype)
    if n_p != n:
        x_p = jnp.pad(x_p, ((0, n_p - n), (0, 0)))
    w_p = w.astype(jnp.float32)
    if c_out_p != c_out:
        w_p = jnp.pad(w_p, ((0, 0), (0, c_out_p - c_out)))

    grid = (n_p // tm, n_p // tk)
    stream_bytes = a_stream.dtype.itemsize

    flops = 2 * n_p * n_p * c_in + 2 * n_p * c_in * c_out_p
    bytes_accessed = (
        n_p * n_p * stream_bytes          # A_hat streamed exactly once
        + n_p * c_in * stream_bytes       # X read once (VMEM-resident)
        + c_in * c_out_p * 4              # W resident
        + n_p * c_out_p * 4               # output writeback
    )

    out = pl.pallas_call(
        functools.partial(_gcn_kernel, tk=tk),
        out_shape=jax.ShapeDtypeStruct((n_p, c_out_p), jnp.float32),
        grid_spec=pltpu.PrefetchScalarGridSpec(
            num_scalar_prefetch=0,
            grid=grid,
            in_specs=[
                # A_hat tile: rows follow i, contraction follows k (streamed).
                pl.BlockSpec((tm, tk), lambda i, k: (i, k)),
                # X: whole (padded) array resident in VMEM for the full grid.
                pl.BlockSpec((n_p, c_in), lambda i, k: (0, 0)),
                # W resident for the whole grid.
                pl.BlockSpec((c_in, c_out_p), lambda i, k: (0, 0)),
            ],
            out_specs=pl.BlockSpec((tm, c_out_p), lambda i, k: (i, 0)),
            scratch_shapes=[pltpu.VMEM((tm, c_in), jnp.float32)],
        ),
        compiler_params=pltpu.CompilerParams(
            dimension_semantics=("parallel", "arbitrary"),
            vmem_limit_bytes=vmem_limit_bytes,
        ),
        cost_estimate=pl.CostEstimate(
            flops=flops, transcendentals=0, bytes_accessed=bytes_accessed
        ),
    )(a_stream, x_p, w_p)

    return out[:n, :c_out]


class GCNKipfLayer:
    """JAX mirror of the PyTorch GCNKipf_Layer module."""

    def __init__(self, adj, input_channels, output_channels, key,
                 tm=None, tk=None, stream_dtype=jnp.bfloat16):
        n = adj.shape[0]
        # D = diag(sum(adj, 1)); D^{-1/2} applied by broadcasting (O(N^2), no
        # dense diag matrix and no N^3 matmuls).
        # TODO(synk): like the PyTorch reference, zero-degree nodes give
        # inf/NaN via 1/sqrt(deg); mirrored rather than guarded against.
        deg = jnp.sum(adj, axis=1)
        d_inv_sqrt = 1.0 / jnp.sqrt(deg)
        a_hat = adj + jnp.eye(n, dtype=adj.dtype)
        a_hat = (a_hat * d_inv_sqrt[:, None] * d_inv_sqrt[None, :]).astype(jnp.float32)
        self.A_hat = a_hat  # f32 copy kept for reference checks / parity with the module
        # W ~ torch.rand(in, out) -> uniform(0, 1), deterministic from key.
        self.W = jax.random.uniform(
            key, (input_channels, output_channels), dtype=jnp.float32
        )

        # Pad + cast A_hat ONCE to the streaming dtype (perf: no per-call
        # full-size pad/convert pass before the kernel).
        n_p = _round_up(n, 128)
        a_p = a_hat if n_p == n else jnp.pad(a_hat, ((0, n_p - n), (0, n_p - n)))
        self._A_stream = a_p.astype(stream_dtype)

        c_out_p = _round_up(output_channels, 128)
        self._vmem_limit = _vmem_budget_bytes()
        self._tm, self._tk = _choose_tiles(
            n_p, input_channels, c_out_p,
            jnp.dtype(stream_dtype).itemsize, self._vmem_limit,
            tm_target=tm, tk_target=tk,
        )

    def __call__(self, x):
        return gcn_kipf_forward(
            self._A_stream, x, self.W,
            tm=self._tm, tk=self._tk, vmem_limit_bytes=self._vmem_limit,
        )


if __name__ == "__main__":
    key = jax.random.PRNGKey(0)
    k_adj, k_x, k_w = jax.random.split(key, 3)

    # Small but non-trivial: N=512 with tm=128 / tk=256 exercises a (4, 2)
    # grid (parallel row tiles + accumulated reduction steps) while staying tiny.
    N, C_IN, C_OUT = 512, 8, 32

    # Synthetic dense weighted adjacency (positive row sums so D is invertible).
    adj = jax.random.uniform(k_adj, (N, N), dtype=jnp.float32)
    adj = 0.5 * (adj + adj.T)  # symmetric, like a typical graph adjacency

    x = jax.random.normal(k_x, (N, C_IN), dtype=jnp.float32)

    layer = GCNKipfLayer(adj, C_IN, C_OUT, k_w, tm=128, tk=256)

    out = jax.block_until_ready(layer(x))
    assert out.shape == (N, C_OUT)

    # Reference 1: identical input quantization (bf16 streaming, f32 accumulate)
    # -> should match the kernel tightly.
    a_s = layer.A_hat.astype(jnp.bfloat16).astype(jnp.float32)
    x_s = x.astype(jnp.bfloat16).astype(jnp.float32)
    ref_bf16 = jnp.maximum((a_s @ x_s) @ layer.W, 0.0)
    assert jnp.allclose(out, ref_bf16, atol=1e-3, rtol=1e-3), float(
        jnp.max(jnp.abs(out - ref_bf16))
    )

    # Reference 2: full-f32 math (same semantics as the PyTorch forward),
    # loose tolerance accounting for bf16 streaming of A_hat / X.
    ref_f32 = jnp.maximum(layer.A_hat @ x @ layer.W, 0.0)
    assert jnp.allclose(out, ref_f32, atol=5e-2, rtol=5e-2), float(
        jnp.max(jnp.abs(out - ref_f32))
    )

    # Also exercise the auto-tiled path (defaults, >=2 row tiles enforced).
    layer_auto = GCNKipfLayer(adj, C_IN, C_OUT, k_w)
    out_auto = jax.block_until_ready(layer_auto(x))
    assert jnp.allclose(out_auto, ref_f32, atol=5e-2, rtol=5e-2)

    print("KERNEL_OK")
</pallas_src>

<mosaic_0001>
module attributes {stable_mosaic.version = 11 : i64} {
  func.func @_gcn_kernel(%arg0: i32, %arg1: i32, %arg2: memref<128x256xbf16, #tpu.memory_space<vmem>>, %arg3: memref<512x8xbf16, #tpu.memory_space<vmem>>, %arg4: memref<8x128xf32, #tpu.memory_space<vmem>>, %arg5: memref<128x128xf32, #tpu.memory_space<vmem>>, %arg6: memref<128x8xf32, #tpu.memory_space<vmem>>) attributes {dimension_semantics = [#tpu.dimension_semantics<parallel>, #tpu.dimension_semantics<arbitrary>], iteration_bounds = array<i64: 4, 2>, scalar_prefetch = 0 : i64, scratch_operands = 1 : i64, tpu.core_type = #tpu.core_type<tc>, window_params = [{transform_indices = @transform_0, window_bounds = array<i64: 128, 256>}, {pipeline_mode = #tpu.pipeline_mode<synchronous>, transform_indices = @transform_1, window_bounds = array<i64: 512, 8>}, {pipeline_mode = #tpu.pipeline_mode<synchronous>, transform_indices = @transform_2, window_bounds = array<i64: 8, 128>}, {transform_indices = @transform_3, window_bounds = array<i64: 128, 128>}]} {
    %c0_i32 = arith.constant 0 : i32
    %0 = arith.cmpi eq, %arg1, %c0_i32 : i32
    %1 = arith.extui %0 : i1 to i32
    %c0_i32_0 = arith.constant 0 : i32
    %2 = arith.cmpi ne, %1, %c0_i32_0 : i32
    scf.if %2 {
      %cst_8 = arith.constant 0.000000e+00 : f32
      %15 = vector.broadcast %cst_8 : f32 to vector<128x8xf32>
      %c0_9 = arith.constant 0 : index
      %c0_10 = arith.constant 0 : index
      %16 = vector.load %arg6[%c0_9, %c0_10] : memref<128x8xf32, #tpu.memory_space<vmem>>, vector<128x8xf32>
      tpu.vector_store %arg6[%c0_9, %c0_10], %15 {strides = array<i32>} : memref<128x8xf32, #tpu.memory_space<vmem>>, vector<128x8xf32>,
    } else {
    }
    %c256_i32 = arith.constant 256 : i32
    %3 = arith.muli %arg1, %c256_i32 : i32
    %4 = tpu.assume_multiple %3, 128 : i32
    %5 = arith.index_cast %4 : i32 to index
    %c0 = arith.constant 0 : index
    %6 = vector.load %arg3[%5, %c0] : memref<512x8xbf16, #tpu.memory_space<vmem>>, vector<256x8xbf16>
    %c0_1 = arith.constant 0 : index
    %c0_2 = arith.constant 0 : index
    %7 = vector.load %arg6[%c0_1, %c0_2] : memref<128x8xf32, #tpu.memory_space<vmem>>, vector<128x8xf32>
    %c0_3 = arith.constant 0 : index
    %c0_4 = arith.constant 0 : index
    %8 = vector.load %arg2[%c0_3, %c0_4] : memref<128x256xbf16, #tpu.memory_space<vmem>>, vector<128x256xbf16>
    %cst = arith.constant dense<0.000000e+00> : vector<128x8xf32>
    %9 = tpu.matmul %8, %6, %cst {dimension_numbers = #tpu.dot_dimension_numbers<[1], [0], [0], [1], [0, 0, 1, 1], [], []>} : vector<128x256xbf16>, vector<256x8xbf16>, vector<128x8xf32> -> vector<128x8xf32>
    %10 = arith.addf %7, %9 : vector<128x8xf32>
    %c0_5 = arith.constant 0 : index
    %c0_6 = arith.constant 0 : index
    %11 = vector.load %arg6[%c0_5, %c0_6] : memref<128x8xf32, #tpu.memory_space<vmem>>, vector<128x8xf32>
    tpu.vector_store %arg6[%c0_5, %c0_6], %10 {strides = array<i32>} : memref<128x8xf32, #tpu.memory_space<vmem>>, vector<128x8xf32>,
    %c1_i32 = arith.constant 1 : i32
    %12 = arith.cmpi eq, %arg1, %c1_i32 : i32
    %13 = arith.extui %12 : i1 to i32
    %c0_i32_7 = arith.constant 0 : i32
    %14 = arith.cmpi ne, %13, %c0_i32_7 : i32
    scf.if %14 {
      %c0_8 = arith.constant 0 : index
      %c0_9 = arith.constant 0 : index
      %15 = vector.load %arg6[%c0_8, %c0_9] : memref<128x8xf32, #tpu.memory_space<vmem>>, vector<128x8xf32>
      %c0_10 = arith.constant 0 : index
      %c0_11 = arith.constant 0 : index
      %16 = vector.load %arg4[%c0_10, %c0_11] : memref<8x128xf32, #tpu.memory_space<vmem>>, vector<8x128xf32>
      %cst_12 = arith.constant dense<0.000000e+00> : vector<128x128xf32>
      %17 = tpu.matmul %15, %16, %cst_12 {dimension_numbers = #tpu.dot_dimension_numbers<[1], [0], [0], [1], [0, 0, 1, 1], [], []>} : vector<128x8xf32>, vector<8x128xf32>, vector<128x128xf32> -> vector<128x128xf32>
      %cst_13 = arith.constant 0.000000e+00 : f32
      %18 = vector.broadcast %cst_13 : f32 to vector<128x128xf32>
      %19 = arith.maximumf %17, %18 : vector<128x128xf32>
      %c0_14 = arith.constant 0 : index
      %c0_15 = arith.constant 0 : index
      %20 = vector.load %arg5[%c0_14, %c0_15] : memref<128x128xf32, #tpu.memory_space<vmem>>, vector<128x128xf32>
      tpu.vector_store %arg5[%c0_14, %c0_15], %19 {strides = array<i32>} : memref<128x128xf32, #tpu.memory_space<vmem>>, vector<128x128xf32>,
    } else {
    }
    return
  }
  func.func @transform_0(%arg0: i32, %arg1: i32) -> (i32, i32) {
    %c0_i32 = arith.constant 0 : i32
    return %arg0, %arg1 : i32, i32
  }
  func.func @transform_1(%arg0: i32, %arg1: i32) -> (i32, i32) {
    %c0_i32 = arith.constant 0 : i32
    %c0_i32_0 = arith.constant 0 : i32
    %c0_i32_1 = arith.constant 0 : i32
    return %c0_i32, %c0_i32_0 : i32, i32
  }
  func.func @transform_2(%arg0: i32, %arg1: i32) -> (i32, i32) {
    %c0_i32 = arith.constant 0 : i32
    %c0_i32_0 = arith.constant 0 : i32
    %c0_i32_1 = arith.constant 0 : i32
    return %c0_i32, %c0_i32_0 : i32, i32
  }
  func.func @transform_3(%arg0: i32, %arg1: i32) -> (i32, i32) {
    %c0_i32 = arith.constant 0 : i32
    %c0_i32_0 = arith.constant 0 : i32
    return %arg0, %c0_i32 : i32, i32
  }
}

</mosaic_0001>

<llo_original>
// kernel: gcn_kipf_forward.1
$region0: #{gcn_kipf_forward.1}
  #allocation0 [shape = 'u32[]', space=smem, size = 0x4, offset = 0x4, fixed_abs, tag = 'smem constant byte address 0x4 - core index']
  #allocation1 [shape = 'u32[144,128]{1,0:T(1,128)}', space=vmem, size = 0x12000, scoped, tag = 'internal scratch']
  #allocation2 [shape = 'f32[128,8]{1,0:T(8,128)}', space=vmem, size = 0x10000, scoped, tag = 'scratch operand']
  %s0 = inlined_call_operand.hbm [shape: bf16[512,512], index: 0, kind: input, shape index: {}]
  %s1 = inlined_call_operand.vmem [shape: bf16[512,8], index: 1, kind: input, shape index: {}]
  %s2 = inlined_call_operand.vmem [shape: f32[8,128], index: 2, kind: input, shape index: {}]
  %s3 = inlined_call_operand.vmem [shape: f32[512,128], index: 3, kind: output, shape index: {}]
  %s4 = sld [smem:[#allocation0]]
  $region57: #{gcn_kipf_forward.1} parent=0
    _
  %s6 = ssub.s32 1, %s4
  %s7 = scalar_select 0, %s6, %s4
  $region1: #{gcn_kipf_forward.1} parent=0
    #allocation3 [shape = 'u8[131072]{0}', space=vmem, size = 0x20000, scoped, tag = 'input window, operand 0']
    #allocation4 [shape = 's32[2]{0}', space=sflag, size = 0x8, scoped, tag = 'scoped memory for gcn_kipf_forward.1']
    %8 = vsyncpa [#allocation4], 0
    %s9 = scalar_lea.sflag [#allocation4], 1
    %10 = vsyncpa %s9, 0
    loop: start=0, step=1, limit=10
    $region2: #{gcn_kipf_forward.1} parent=1 // loop_pre_header
      _
    $region3: #{gcn_kipf_forward.1} parent=1 // loop_header
      %s12 = sphi 0, %s16
      %p13 = scmp.ge.s32.totalorder %s12, 10
      %s19 = sphi 0, %s31
      %s20 = sphi 0, %s27
      %s21 = sphi 0, %s19
      %s22 = sphi 0, %s20
      %s23 = sphi 0, %s21
      %s24 = sphi 0, %s22
      %s36 = sphi 0, %s38
      %s39 = sphi 0, %s36
      %s40 = sphi 0, %s39
      %s56 = sphi 0, %s40
      %s60 = sphi 0, %s60
      %s62 = sphi 0, %s60
      %s63 = sphi 0, %s62
      %s77 = sphi 0, %s63
      %s81 = sphi 0, %s81
      %s83 = sphi 0, %s81
      %s84 = sphi 0, %s83
      %s98 = sphi 0, %s84
      %s104 = sphi 0, %s106
      %s107 = sphi 0, %s104
      %s108 = sphi 0, %s107
      %s124 = sphi 0, %s108
    $region4: #{gcn_kipf_forward.1} parent=1 // loop_header_branch
      %15 = sbr.rel (%p13) target = $region8
    $region5: #{gcn_kipf_forward.1} parent=1 // loop_body
      %s17 = ssub.s32 %s12, 1
      %s18 = ssub.s32 %s12, 2
      %s25 = sadd.s32 1, %s20
      %p26 = scmp.ge.s32.totalorder %s25, 2
      %s27 = scalar_select %p26, 0, %s25
      %s28 = sadd.s32 1, %s19
      %s29 = scalar_select %p26, %s28, %s19
      %p30 = scmp.ge.s32.totalorder %s29, 4
      %s31 = scalar_select %p30, 0, %s29
      %s32 = ssub.s32 %s19, %s31
      %s33 = ssub.s32 %s20, %s27
      %s34 = sor.u32 %s32, %s33
      %p35 = scmp.eq.s32.totalorder %s34, 0
      %s37 = sadd.s32 %s36, 1
      %s38 = scalar_select %p35, %s36, %s37
      %p41 = pneg %p35
      %p42 = scmp.eq.s32.totalorder %s12, 7
      %p43 = por %p41, %p42
      %p44 = scmp.ne.s32.totalorder %s36, %s39
      %p45 = scmp.eq.s32.totalorder %s12, 0
      %p46 = por %p44, %p45
      %p47 = scmp.ne.s32.totalorder %s36, %s39
      %p48 = scmp.eq.s32.totalorder %s17, 7
      %p49 = por %p47, %p48
      %p50 = scmp.ne.s32.totalorder %s39, %s40
      %p51 = scmp.eq.s32.totalorder %s17, 0
      %p52 = por %p50, %p51
      %p53 = scmp.ne.s32.totalorder %s39, %s40
      %p54 = scmp.eq.s32.totalorder %s18, 7
      %p55 = por %p53, %p54
      %p57 = scmp.ne.s32.totalorder %s40, %s56
      %p58 = scmp.eq.s32.totalorder %s18, 0
      %p59 = por %p57, %p58
      %s61 = sadd.s32 %s60, 1
      %p64 = scmp.eq.s32.totalorder %s12, 7
      %p65 = scmp.ne.s32.totalorder %s60, %s62
      %p66 = scmp.eq.s32.totalorder %s12, 0
      %p67 = por %p65, %p66
      %p68 = scmp.ne.s32.totalorder %s60, %s62
      %p69 = scmp.eq.s32.totalorder %s17, 7
      %p70 = por %p68, %p69
      %p71 = scmp.ne.s32.totalorder %s62, %s63
      %p72 = scmp.eq.s32.totalorder %s17, 0
      %p73 = por %p71, %p72
      %p74 = scmp.ne.s32.totalorder %s62, %s63
      %p75 = scmp.eq.s32.totalorder %s18, 7
      %p76 = por %p74, %p75
      %p78 = scmp.ne.s32.totalorder %s63, %s77
      %p79 = scmp.eq.s32.totalorder %s18, 0
      %p80 = por %p78, %p79
      %s82 = sadd.s32 %s81, 1
      %p85 = scmp.eq.s32.totalorder %s12, 7
      %p86 = scmp.ne.s32.totalorder %s81, %s83
      %p87 = scmp.eq.s32.totalorder %s12, 0
      %p88 = por %p86, %p87
      %p89 = scmp.ne.s32.totalorder %s81, %s83
      %p90 = scmp.eq.s32.totalorder %s17, 7
      %p91 = por %p89, %p90
      %p92 = scmp.ne.s32.totalorder %s83, %s84
      %p93 = scmp.eq.s32.totalorder %s17, 0
      %p94 = por %p92, %p93
      %p95 = scmp.ne.s32.totalorder %s83, %s84
      %p96 = scmp.eq.s32.totalorder %s18, 7
      %p97 = por %p95, %p96
      %p99 = scmp.ne.s32.totalorder %s84, %s98
      %p100 = scmp.eq.s32.totalorder %s18, 0
      %p101 = por %p99, %p100
      %s102 = ssub.s32 %s19, %s31
      %p103 = scmp.eq.s32.totalorder %s102, 0
      %s105 = sadd.s32 %s104, 1
      %s106 = scalar_select %p103, %s104, %s105
      %p109 = pneg %p103
      %p110 = scmp.eq.s32.totalorder %s12, 7
      %p111 = por %p109, %p110
      %p112 = scmp.ne.s32.totalorder %s104, %s107
      %p113 = scmp.eq.s32.totalorder %s12, 0
      %p114 = por %p112, %p113
      %p115 = scmp.ne.s32.totalorder %s104, %s107
      %p116 = scmp.eq.s32.totalorder %s17, 7
      %p117 = por %p115, %p116
      %p118 = scmp.ne.s32.totalorder %s107, %s108
      %p119 = scmp.eq.s32.totalorder %s17, 0
      %p120 = por %p118, %p119
      %p121 = scmp.ne.s32.totalorder %s107, %s108
      %p122 = scmp.eq.s32.totalorder %s18, 7
      %p123 = por %p121, %p122
      %p125 = scmp.ne.s32.totalorder %s108, %s124
      %p126 = scmp.eq.s32.totalorder %s18, 0
      %p127 = por %p125, %p126
      %p128 = scmp.le.s32.totalorder 1, %s12
      %p129 = scmp.lt.s32.totalorder %s12, 9
      %p130 = pnand %p128, %p129
      %p131 = pneg %p130
      // Predicated region
      $region9: #{gcn_kipf_forward.1} parent=5 // pred_check
        _
      $region10: #{gcn_kipf_forward.1} parent=5 // pred_check_branch
        %133 = sbr.rel (%p130) target = $region12
      $region11: #{gcn_kipf_forward.1} parent=5 // pred_region
        %s134 = ssub.s32 %s12, 1
        // Predicated region
        $region13: #{gcn_kipf_forward.1} parent=11 // pred_check
          %p135 = pneg %p73
        $region14: #{gcn_kipf_forward.1} parent=11 // pred_check_branch
          %137 = sbr.rel (%p135) target = $region16
        $region15: #{gcn_kipf_forward.1} parent=11 // pred_region
          _
        $region16: #{gcn_kipf_forward.1} parent=11 // pred_fallthru
          _
        // Predicated region
        $region17: #{gcn_kipf_forward.1} parent=11 // pred_check
          %p138 = pneg %p94
        $region18: #{gcn_kipf_forward.1} parent=11 // pred_check_branch
          %140 = sbr.rel (%p138) target = $region20
        $region19: #{gcn_kipf_forward.1} parent=11 // pred_region
          _
        $region20: #{gcn_kipf_forward.1} parent=11 // pred_fallthru
          _
      $region12: #{gcn_kipf_forward.1} parent=5 // pred_fallthru
        _
      %p141 = scmp.lt.s32.totalorder %s12, 8
      // Predicated region
      $region21: #{gcn_kipf_forward.1} parent=5 // pred_check
        %p142 = pneg %p141
      $region22: #{gcn_kipf_forward.1} parent=5 // pred_check_branch
        %144 = sbr.rel (%p142) target = $region24
      $region23: #{gcn_kipf_forward.1} parent=5 // pred_region
        // Predicated region
        $region25: #{gcn_kipf_forward.1} parent=23 // pred_check
          %p145 = pneg %p46
        $region26: #{gcn_kipf_forward.1} parent=23 // pred_check_branch
          %147 = sbr.rel (%p145) target = $region28
        $region27: #{gcn_kipf_forward.1} parent=23 // pred_region
          %s148 = sand.u32 %s36, 1
          %s149 = scalar_lea.sflag [#allocation4], %s148
          %s150 = sand.u32 %s36, 1
          %s151 = smul.addr %s150, 128
          %s152 = scalar_lea.vmem [#allocation3], %s151
          %s153 = smul.u32 16, %s19
          %s154 = smul.u32 2, %s20
          %s156 = ssub.s32 2048, 2048
          %157 = vsyncadd %s149, %s156
          %s158 = smul.addr %s153, 4
          %s159 = sadd.s32 %s154, %s158
          %s160 = smul.addr %s159, 64
          %s161 = scalar_lea.hbm %s0, %s160
          %s162 = sshll.u32 %s152, 4
          %s163 = int_to_ptr.vmem [resolvable:$true] %s162
          %168 = dma.hbm_to_vmem [thread:$0]  %s161, 2048, %s163, %s149, 256, 128, 8
        $region28: #{gcn_kipf_forward.1} parent=23 // pred_fallthru
          _
      $region24: #{gcn_kipf_forward.1} parent=5 // pred_fallthru
        _
      %p169 = scmp.le.s32.totalorder 1, %s12
      %p170 = scmp.lt.s32.totalorder %s12, 9
      %p171 = pnand %p169, %p170
      %p172 = pneg %p171
      // Predicated region
      $region29: #{gcn_kipf_forward.1} parent=5 // pred_check
        _
      $region30: #{gcn_kipf_forward.1} parent=5 // pred_check_branch
        %174 = sbr.rel (%p171) target = $region32
      $region31: #{gcn_kipf_forward.1} parent=5 // pred_region
        %s175 = ssub.s32 %s12, 1
        %s176 = sand.u32 %s39, 1
        %s177 = scalar_lea.sflag [#allocation4], %s176
        %s178 = sand.u32 %s39, 1
        %s179 = smul.addr %s178, 128
        %s180 = scalar_lea.vmem [#allocation3], %s179
        // Predicated region
        $region33: #{gcn_kipf_forward.1} parent=31 // pred_check
          %p181 = pneg %p52
        $region34: #{gcn_kipf_forward.1} parent=31 // pred_check_branch
          %183 = sbr.rel (%p181) target = $region36
        $region35: #{gcn_kipf_forward.1} parent=31 // pred_region
          %184 = dma.done %s177, 2048
        $region36: #{gcn_kipf_forward.1} parent=31 // pred_fallthru
          _
        %s185 = sand.u32 %s39, 1
        %s186 = scalar_lea.sflag [#allocation4], %s185
        %s187 = sand.u32 %s39, 1
        %s188 = smul.addr %s187, 128
        %s189 = scalar_lea.vmem [#allocation3], %s188
        %p190 = pneg %p52
        %p191 = pneg %p49
        %p192 = pneg %p73
        %p193 = pneg %p70
        %p194 = pneg %p94
        %p195 = pneg %p91
        %p196 = pneg %p120
        %p197 = pneg %p117
        %s198 = smul.u32 16, %s21
        %p199 = scmp.lt.s32.totalorder %s198, 63
        %s200 = scalar_select %p199, %s198, 63
        %s201 = smul.addr %s200, 8
        %s202 = scalar_lea.vmem %s3, %s201
        %s203 = smul.u32 16, %s21
        %s204 = smul.u32 2, %s22
        %s205 = smul.u32 16, %s21
        %p206 = scmp.lt.s32.totalorder %s205, 63
        %s207 = scalar_select %p206, %s205, 63
        %s208 = smul.addr %s207, 8
        %s209 = scalar_lea.vmem %s3, %s208
        %s210 = smul.u32 16, %s21
        %p212 = scmp.eq.s32.totalorder %s22, 0
        // Predicated region
        $region37: #{gcn_kipf_forward.1} parent=31 // pred_check
          %p213 = pneg %p212
        $region38: #{gcn_kipf_forward.1} parent=31 // pred_check_branch
          %215 = sbr.rel (%p213) target = $region40
        $region39: #{gcn_kipf_forward.1} parent=31 // pred_region
          %vm216 = vcmask 64512
          %217 = vst.msk [vmem:[#allocation2] sm:$0xff] %vm216, 0.0
          %218 = vst.msk [vmem:[#allocation2 + $0x8] sm:$0xff] %vm216, 0.0
          %219 = vst.msk [vmem:[#allocation2 + $0x10] sm:$0xff] %vm216, 0.0
          %220 = vst.msk [vmem:[#allocation2 + $0x18] sm:$0xff] %vm216, 0.0
          %221 = vst.msk [vmem:[#allocation2 + $0x20] sm:$0xff] %vm216, 0.0
          %222 = vst.msk [vmem:[#allocation2 + $0x28] sm:$0xff] %vm216, 0.0
          %223 = vst.msk [vmem:[#allocation2 + $0x30] sm:$0xff] %vm216, 0.0
          %224 = vst.msk [vmem:[#allocation2 + $0x38] sm:$0xff] %vm216, 0.0
          %225 = vst.msk [vmem:[#allocation2 + $0x40] sm:$0xff] %vm216, 0.0
          %226 = vst.msk [vmem:[#allocation2 + $0x48] sm:$0xff] %vm216, 0.0
          %227 = vst.msk [vmem:[#allocation2 + $0x50] sm:$0xff] %vm216, 0.0
          %228 = vst.msk [vmem:[#allocation2 + $0x58] sm:$0xff] %vm216, 0.0
          %229 = vst.msk [vmem:[#allocation2 + $0x60] sm:$0xff] %vm216, 0.0
          %230 = vst.msk [vmem:[#allocation2 + $0x68] sm:$0xff] %vm216, 0.0
          %231 = vst.msk [vmem:[#allocation2 + $0x70] sm:$0xff] %vm216, 0.0
          %232 = vst.msk [vmem:[#allocation2 + $0x78] sm:$0xff] %vm216, 0.0
        $region40: #{gcn_kipf_forward.1} parent=31 // pred_fallthru
          _
        %s233 = smul.u32 %s22, 256
        %s234 = sshra.s32 %s233, 3
        %s235 = sand.u32 %s233, 7
        %s236 = smul.addr %s234, 4
        %s237 = scalar_lea.vmem %s1, %s236
        %v238 = vld [vmem:[%s237] sm:$0xf]
        %v239 = vld [vmem:[%s237 + $0x4] sm:$0xf]
        %v240 = vld [vmem:[%s237 + $0x8] sm:$0xf]
        %v241 = vld [vmem:[%s237 + $0xc] sm:$0xf]
        %v242 = vld [vmem:[%s237 + $0x10] sm:$0xf]
        %v243 = vld [vmem:[%s237 + $0x14] sm:$0xf]
        %v244 = vld [vmem:[%s237 + $0x18] sm:$0xf]
        %v245 = vld [vmem:[%s237 + $0x1c] sm:$0xf]
        %v246 = vld [vmem:[%s237 + $0x20] sm:$0xf]
        %v247 = vld [vmem:[%s237 + $0x24] sm:$0xf]
        %v248 = vld [vmem:[%s237 + $0x28] sm:$0xf]
        %v249 = vld [vmem:[%s237 + $0x2c] sm:$0xf]
        %v250 = vld [vmem:[%s237 + $0x30] sm:$0xf]
        %v251 = vld [vmem:[%s237 + $0x34] sm:$0xf]
        %v252 = vld [vmem:[%s237 + $0x38] sm:$0xf]
        %v253 = vld [vmem:[%s237 + $0x3c] sm:$0xf]
        %v254 = vld [vmem:[%s237 + $0x40] sm:$0xf]
        %v255 = vld [vmem:[%s237 + $0x44] sm:$0xf]
        %v256 = vld [vmem:[%s237 + $0x48] sm:$0xf]
        %v257 = vld [vmem:[%s237 + $0x4c] sm:$0xf]
        %v258 = vld [vmem:[%s237 + $0x50] sm:$0xf]
        %v259 = vld [vmem:[%s237 + $0x54] sm:$0xf]
        %v260 = vld [vmem:[%s237 + $0x58] sm:$0xf]
        %v261 = vld [vmem:[%s237 + $0x5c] sm:$0xf]
        %v262 = vld [vmem:[%s237 + $0x60] sm:$0xf]
        %v263 = vld [vmem:[%s237 + $0x64] sm:$0xf]
        %v264 = vld [vmem:[%s237 + $0x68] sm:$0xf]
        %v265 = vld [vmem:[%s237 + $0x6c] sm:$0xf]
        %v266 = vld [vmem:[%s237 + $0x70] sm:$0xf]
        %v267 = vld [vmem:[%s237 + $0x74] sm:$0xf]
        %v268 = vld [vmem:[%s237 + $0x78] sm:$0xf]
        %v269 = vld [vmem:[%s237 + $0x7c] sm:$0xf]
        %v270 = vld [vmem:[#allocation2] sm:$0xff]
        %v271 = vld [vmem:[#allocation2 + $0x8] sm:$0xff]
        %v272 = vld [vmem:[#allocation2 + $0x10] sm:$0xff]
        %v273 = vld [vmem:[#allocation2 + $0x18] sm:$0xff]
        %v274 = vld [vmem:[#allocation2 + $0x20] sm:$0xff]
        %v275 = vld [vmem:[#allocation2 + $0x28] sm:$0xff]
        %v276 = vld [vmem:[#allocation2 + $0x30] sm:$0xff]
        %v277 = vld [vmem:[#allocation2 + $0x38] sm:$0xff]
        %v278 = vld [vmem:[#allocation2 + $0x40] sm:$0xff]
        %v279 = vld [vmem:[#allocation2 + $0x48] sm:$0xff]
        %v280 = vld [vmem:[#allocation2 + $0x50] sm:$0xff]
        %v281 = vld [vmem:[#allocation2 + $0x58] sm:$0xff]
        %v282 = vld [vmem:[#allocation2 + $0x60] sm:$0xff]
        %v283 = vld [vmem:[#allocation2 + $0x68] sm:$0xff]
        %v284 = vld [vmem:[#allocation2 + $0x70] sm:$0xff]
        %v285 = vld [vmem:[#allocation2 + $0x78] sm:$0xff]
        %v286 = vld [vmem:[%s180] sm:$0xff]
        %v287 = vld [vmem:[%s180 + $0x8] sm:$0xff]
        %v288 = vld [vmem:[%s180 + $0x10] sm:$0xff]
        %v289 = vld [vmem:[%s180 + $0x18] sm:$0xff]
        %v290 = vld [vmem:[%s180 + $0x20] sm:$0xff]
        %v291 = vld [vmem:[%s180 + $0x28] sm:$0xff]
        %v292 = vld [vmem:[%s180 + $0x30] sm:$0xff]
        %v293 = vld [vmem:[%s180 + $0x38] sm:$0xff]
        %v294 = vld [vmem:[%s180 + $0x40] sm:$0xff]
        %v295 = vld [vmem:[%s180 + $0x48] sm:$0xff]
        %v296 = vld [vmem:[%s180 + $0x50] sm:$0xff]
        %v297 = vld [vmem:[%s180 + $0x58] sm:$0xff]
        %v298 = vld [vmem:[%s180 + $0x60] sm:$0xff]
        %v299 = vld [vmem:[%s180 + $0x68] sm:$0xff]
        %v300 = vld [vmem:[%s180 + $0x70] sm:$0xff]
        %v301 = vld [vmem:[%s180 + $0x78] sm:$0xff]
        %v318 = vunpack.c.l.b16 %v286
        %v319 = vunpack.c.h.b16 %v286
        %v320 = vunpack.c.l.b16 %v287
        %v321 = vunpack.c.h.b16 %v287
        %v322 = vunpack.c.l.b16 %v288
        %v323 = vunpack.c.h.b16 %v288
        %v324 = vunpack.c.l.b16 %v289
        %v325 = vunpack.c.h.b16 %v289
        %v326 = vunpack.c.l.b16 %v290
        %v327 = vunpack.c.h.b16 %v290
        %v328 = vunpack.c.l.b16 %v291
        %v329 = vunpack.c.h.b16 %v291
        %v330 = vunpack.c.l.b16 %v292
        %v331 = vunpack.c.h.b16 %v292
        %v332 = vunpack.c.l.b16 %v293
        %v333 = vunpack.c.h.b16 %v293
        %v334 = vunpack.c.l.b16 %v294
        %v335 = vunpack.c.h.b16 %v294
        %v336 = vunpack.c.l.b16 %v295
        %v337 = vunpack.c.h.b16 %v295
        %v338 = vunpack.c.l.b16 %v296
        %v339 = vunpack.c.h.b16 %v296
        %v340 = vunpack.c.l.b16 %v297
        %v341 = vunpack.c.h.b16 %v297
        %v342 = vunpack.c.l.b16 %v298
        %v343 = vunpack.c.h.b16 %v298
        %v344 = vunpack.c.l.b16 %v299
        %v345 = vunpack.c.h.b16 %v299
        %v346 = vunpack.c.l.b16 %v300
        %v347 = vunpack.c.h.b16 %v300
        %v348 = vunpack.c.l.b16 %v301
        %v349 = vunpack.c.h.b16 %v301
        %v350 = vpack.c.b16 %v320, %v318
        %v351 = vpack.c.b16 %v321, %v319
        %v352 = vpack.c.b16 %v324, %v322
        %v353 = vpack.c.b16 %v325, %v323
        %v354 = vpack.c.b16 %v328, %v326
        %v355 = vpack.c.b16 %v329, %v327
        %v356 = vpack.c.b16 %v332, %v330
        %v357 = vpack.c.b16 %v333, %v331
        %v358 = vpack.c.b16 %v336, %v334
        %v359 = vpack.c.b16 %v337, %v335
        %v360 = vpack.c.b16 %v340, %v338
        %v361 = vpack.c.b16 %v341, %v339
        %v362 = vpack.c.b16 %v344, %v342
        %v363 = vpack.c.b16 %v345, %v343
        %v364 = vpack.c.b16 %v348, %v346
        %v365 = vpack.c.b16 %v349, %v347
        %v414 = vunpack.c.l.b16 %v238
        %v415 = vunpack.c.l.b16 %v239
        %v416 = vunpack.c.l.b16 %v240
        %v417 = vunpack.c.l.b16 %v241
        %v418 = vunpack.c.l.b16 %v242
        %v419 = vunpack.c.l.b16 %v243
        %v420 = vunpack.c.l.b16 %v244
        %v421 = vunpack.c.l.b16 %v245
        %v422 = vunpack.c.l.b16 %v246
        %v423 = vunpack.c.l.b16 %v247
        %v424 = vunpack.c.l.b16 %v248
        %v425 = vunpack.c.l.b16 %v249
        %v426 = vunpack.c.l.b16 %v250
        %v427 = vunpack.c.l.b16 %v251
        %v428 = vunpack.c.l.b16 %v252
        %v429 = vunpack.c.l.b16 %v253
        %v430 = vunpack.c.l.b16 %v254
        %v431 = vunpack.c.l.b16 %v255
        %v432 = vunpack.c.l.b16 %v256
        %v433 = vunpack.c.l.b16 %v257
        %v434 = vunpack.c.l.b16 %v258
        %v435 = vunpack.c.l.b16 %v259
        %v436 = vunpack.c.l.b16 %v260
        %v437 = vunpack.c.l.b16 %v261
        %v438 = vunpack.c.l.b16 %v262
        %v439 = vunpack.c.l.b16 %v263
        %v440 = vunpack.c.l.b16 %v264
        %v441 = vunpack.c.l.b16 %v265
        %v442 = vunpack.c.l.b16 %v266
        %v443 = vunpack.c.l.b16 %v267
        %v444 = vunpack.c.l.b16 %v268
        %v445 = vunpack.c.l.b16 %v269
        %v446 = vpack.c.b16 %v415, %v414
        %v447 = vpack.c.b16 %v417, %v416
        %v448 = vpack.c.b16 %v419, %v418
        %v449 = vpack.c.b16 %v421, %v420
        %v450 = vpack.c.b16 %v423, %v422
        %v451 = vpack.c.b16 %v425, %v424
        %v452 = vpack.c.b16 %v427, %v426
        %v453 = vpack.c.b16 %v429, %v428
        %v454 = vpack.c.b16 %v431, %v430
        %v455 = vpack.c.b16 %v433, %v432
        %v456 = vpack.c.b16 %v435, %v434
        %v457 = vpack.c.b16 %v437, %v436
        %v458 = vpack.c.b16 %v439, %v438
        %v459 = vpack.c.b16 %v441, %v440
        %v460 = vpack.c.b16 %v443, %v442
        %v461 = vpack.c.b16 %v445, %v444
        %478 = vmatprep.subr.bf16.mxu0 0
        %479 = vmatpush1.bf16.msra.mxu0 %v446
        %480 = vmatprep.subr.bf16.mxu0 0
        %481 = vmatpush1.bf16.msra.mxu0 %v447
        %482 = vmatprep.subr.bf16.mxu0 0
        %483 = vmatpush1.bf16.msra.mxu0 %v448
        %484 = vmatprep.subr.bf16.mxu0 0
        %485 = vmatpush1.bf16.msra.mxu0 %v449
        %486 = vmatprep.subr.bf16.mxu0 0
        %487 = vmatpush1.bf16.msra.mxu0 %v450
        %488 = vmatprep.subr.bf16.mxu0 0
        %489 = vmatpush1.bf16.msra.mxu0 %v451
        %490 = vmatprep.subr.bf16.mxu0 0
        %491 = vmatpush1.bf16.msra.mxu0 %v452
        %492 = vmatprep.subr.bf16.mxu0 0
        %493 = vmatpush1.bf16.msra.mxu0 %v453
        %494 = vmatprep.subr.bf16.mxu0 0
        %495 = vmatpush1.bf16.msra.mxu0 %v454
        %496 = vmatprep.subr.bf16.mxu0 0
        %497 = vmatpush1.bf16.msra.mxu0 %v455
        %498 = vmatprep.subr.bf16.mxu0 0
        %499 = vmatpush1.bf16.msra.mxu0 %v456
        %500 = vmatprep.subr.bf16.mxu0 0
        %501 = vmatpush1.bf16.msra.mxu0 %v457
        %502 = vmatprep.subr.bf16.mxu0 0
        %503 = vmatpush1.bf16.msra.mxu0 %v458
        %504 = vmatprep.subr.bf16.mxu0 0
        %505 = vmatpush1.bf16.msra.mxu0 %v459
        %506 = vmatprep.subr.bf16.mxu0 0
        %507 = vmatpush1.bf16.msra.mxu0 %v460
        %508 = vmatprep.subr.bf16.mxu0 0
        %509 = vmatpush1.bf16.msra.mxu0 %v461
        %510 = vmatprep.mubr.bf16.mxu0 %v351
        %511 = vmatmul.mubr.bf16.gmra.mrb[0].mxu0 %v350
        %v512 = vpop.f32.mrb[0].mxu0
        %v513 = vadd.f32 0.0, %v512
        %v514 = vpop.f32.mrb[0].mxu0
        %v515 = vpop.f32.mrb[0].mxu0
        %v516 = vadd.f32 0.0, %v515
        %v517 = vpop.f32.mrb[0].mxu0
        %518 = vmatprep.mubr.bf16.mxu0 %v353
        %519 = vmatmul.mubr.bf16.gmra.mrb[0].mxu0 %v352
        %v520 = vpop.f32.mrb[0].mxu0
        %v521 = vadd.f32 0.0, %v520
        %v522 = vpop.f32.mrb[0].mxu0
        %v523 = vpop.f32.mrb[0].mxu0
        %v524 = vadd.f32 0.0, %v523
        %v525 = vpop.f32.mrb[0].mxu0
        %526 = vmatprep.mubr.bf16.mxu0 %v355
        %527 = vmatmul.mubr.bf16.gmra.mrb[0].mxu0 %v354
        %v528 = vpop.f32.mrb[0].mxu0
        %v529 = vadd.f32 0.0, %v528
        %v530 = vpop.f32.mrb[0].mxu0
        %v531 = vpop.f32.mrb[0].mxu0
        %v532 = vadd.f32 0.0, %v531
        %v533 = vpop.f32.mrb[0].mxu0
        %534 = vmatprep.mubr.bf16.mxu0 %v357
        %535 = vmatmul.mubr.bf16.gmra.mrb[0].mxu0 %v356
        %v536 = vpop.f32.mrb[0].mxu0
        %v537 = vadd.f32 0.0, %v536
        %v538 = vpop.f32.mrb[0].mxu0
        %v539 = vpop.f32.mrb[0].mxu0
        %v540 = vadd.f32 0.0, %v539
        %v541 = vpop.f32.mrb[0].mxu0
        %542 = vmatprep.mubr.bf16.mxu0 %v359
        %543 = vmatmul.mubr.bf16.gmra.mrb[0].mxu0 %v358
        %v544 = vpop.f32.mrb[0].mxu0
        %v545 = vadd.f32 0.0, %v544
        %v546 = vpop.f32.mrb[0].mxu0
        %v547 = vpop.f32.mrb[0].mxu0
        %v548 = vadd.f32 0.0, %v547
        %v549 = vpop.f32.mrb[0].mxu0
        %550 = vmatprep.mubr.bf16.mxu0 %v361
        %551 = vmatmul.mubr.bf16.gmra.mrb[0].mxu0 %v360
        %v552 = vpop.f32.mrb[0].mxu0
        %v553 = vadd.f32 0.0, %v552
        %v554 = vpop.f32.mrb[0].mxu0
        %v555 = vpop.f32.mrb[0].mxu0
        %v556 = vadd.f32 0.0, %v555
        %v557 = vpop.f32.mrb[0].mxu0
        %558 = vmatprep.mubr.bf16.mxu0 %v363
        %559 = vmatmul.mubr.bf16.gmra.mrb[0].mxu0 %v362
        %v560 = vpop.f32.mrb[0].mxu0
        %v561 = vadd.f32 0.0, %v560
        %v562 = vpop.f32.mrb[0].mxu0
        %v563 = vpop.f32.mrb[0].mxu0
        %v564 = vadd.f32 0.0, %v563
        %v565 = vpop.f32.mrb[0].mxu0
        %566 = vmatprep.mubr.bf16.mxu0 %v365
        %567 = vmatmul.mubr.bf16.gmra.mrb[0].mxu0 %v364
        %v568 = vpop.f32.mrb[0].mxu0
        %v569 = vadd.f32 0.0, %v568
        %v570 = vpop.f32.mrb[0].mxu0
        %v571 = vpop.f32.mrb[0].mxu0
        %v572 = vadd.f32 0.0, %v571
        %v573 = vpop.f32.mrb[0].mxu0
        %574 = vdwg.mxu0
        %v575 = vadd.f32 %v270, %v513
        %v576 = vadd.f32 %v271, %v516
        %v577 = vadd.f32 %v272, %v521
        %v578 = vadd.f32 %v273, %v524
        %v579 = vadd.f32 %v274, %v529
        %v580 = vadd.f32 %v275, %v532
        %v581 = vadd.f32 %v276, %v537
        %v582 = vadd.f32 %v277, %v540
        %v583 = vadd.f32 %v278, %v545
        %v584 = vadd.f32 %v279, %v548
        %v585 = vadd.f32 %v280, %v553
        %v586 = vadd.f32 %v281, %v556
        %v587 = vadd.f32 %v282, %v561
        %v588 = vadd.f32 %v283, %v564
        %v589 = vadd.f32 %v284, %v569
        %v590 = vadd.f32 %v285, %v572
        %vm591 = vcmask 64512
        %592 = vst.msk [vmem:[#allocation2] sm:$0xff] %vm591, %v575
        %593 = vst.msk [vmem:[#allocation2 + $0x8] sm:$0xff] %vm591, %v576
        %594 = vst.msk [vmem:[#allocation2 + $0x10] sm:$0xff] %vm591, %v577
        %595 = vst.msk [vmem:[#allocation2 + $0x18] sm:$0xff] %vm591, %v578
        %596 = vst.msk [vmem:[#allocation2 + $0x20] sm:$0xff] %vm591, %v579
        %597 = vst.msk [vmem:[#allocation2 + $0x28] sm:$0xff] %vm591, %v580
        %598 = vst.msk [vmem:[#allocation2 + $0x30] sm:$0xff] %vm591, %v581
        %599 = vst.msk [vmem:[#allocation2 + $0x38] sm:$0xff] %vm591, %v582
        %600 = vst.msk [vmem:[#allocation2 + $0x40] sm:$0xff] %vm591, %v583
        %601 = vst.msk [vmem:[#allocation2 + $0x48] sm:$0xff] %vm591, %v584
        %602 = vst.msk [vmem:[#allocation2 + $0x50] sm:$0xff] %vm591, %v585
        %603 = vst.msk [vmem:[#allocation2 + $0x58] sm:$0xff] %vm591, %v586
        %604 = vst.msk [vmem:[#allocation2 + $0x60] sm:$0xff] %vm591, %v587
        %605 = vst.msk [vmem:[#allocation2 + $0x68] sm:$0xff] %vm591, %v588
        %606 = vst.msk [vmem:[#allocation2 + $0x70] sm:$0xff] %vm591, %v589
        %607 = vst.msk [vmem:[#allocation2 + $0x78] sm:$0xff] %vm591, %v590
        %p608 = scmp.eq.s32.totalorder %s22, 1
        // Predicated region
        $region41: #{gcn_kipf_forward.1} parent=31 // pred_check
          %p609 = pneg %p608
        $region42: #{gcn_kipf_forward.1} parent=31 // pred_check_branch
          %611 = sbr.rel (%p609) target = $region44
        $region43: #{gcn_kipf_forward.1} parent=31 // pred_region
          %v612 = vld [vmem:[#allocation2] sm:$0xff]
          %v613 = vld [vmem:[#allocation2 + $0x8] sm:$0xff]
          %v614 = vld [vmem:[#allocation2 + $0x10] sm:$0xff]
          %v615 = vld [vmem:[#allocation2 + $0x18] sm:$0xff]
          %v616 = vld [vmem:[#allocation2 + $0x20] sm:$0xff]
          %v617 = vld [vmem:[#allocation2 + $0x28] sm:$0xff]
          %v618 = vld [vmem:[#allocation2 + $0x30] sm:$0xff]
          %v619 = vld [vmem:[#allocation2 + $0x38] sm:$0xff]
          %v620 = vld [vmem:[#allocation2 + $0x40] sm:$0xff]
          %v621 = vld [vmem:[#allocation2 + $0x48] sm:$0xff]
          %v622 = vld [vmem:[#allocation2 + $0x50] sm:$0xff]
          %v623 = vld [vmem:[#allocation2 + $0x58] sm:$0xff]
          %v624 = vld [vmem:[#allocation2 + $0x60] sm:$0xff]
          %v625 = vld [vmem:[#allocation2 + $0x68] sm:$0xff]
          %v626 = vld [vmem:[#allocation2 + $0x70] sm:$0xff]
          %v627 = vld [vmem:[#allocation2 + $0x78] sm:$0xff]
          %v628 = vld [vmem:[%s2] sm:$0xff]
          %v630 = vsel %vm591, %v612, 0
          %v633 = vsel %vm591, %v613, 0
          %v636 = vsel %vm591, %v614, 0
          %v639 = vsel %vm591, %v615, 0
          %v642 = vsel %vm591, %v616, 0
          %v645 = vsel %vm591, %v617, 0
          %v648 = vsel %vm591, %v618, 0
          %v651 = vsel %vm591, %v619, 0
          %v654 = vsel %vm591, %v620, 0
          %v657 = vsel %vm591, %v621, 0
          %v660 = vsel %vm591, %v622, 0
          %v663 = vsel %vm591, %v623, 0
          %v666 = vsel %vm591, %v624, 0
          %v669 = vsel %vm591, %v625, 0
          %v672 = vsel %vm591, %v626, 0
          %v675 = vsel %vm591, %v627, 0
          %677 = vmatprep.subr.mxu0 0.0
          %678 = vmatpush1.msra.mxu0 %v628
          %679 = vmatprep.subr.mxu0 0.0
          %680 = vmatpush1.msra.mxu0 0.0
          %681 = vmatprep.subr.mxu0 0.0
          %682 = vmatpush1.msra.mxu0 0.0
          %683 = vmatprep.subr.mxu0 0.0
          %684 = vmatpush1.msra.mxu0 0.0
          %685 = vmatprep.subr.mxu0 0.0
          %686 = vmatpush1.msra.mxu0 0.0
          %687 = vmatprep.subr.mxu0 0.0
          %688 = vmatpush1.msra.mxu0 0.0
          %689 = vmatprep.subr.mxu0 0.0
          %690 = vmatpush1.msra.mxu0 0.0
          %691 = vmatprep.subr.mxu0 0.0
          %692 = vmatpush1.msra.mxu0 0.0
          %693 = vmatprep.subr.mxu0 0.0
          %694 = vmatpush1.msra.mxu0 0.0
          %695 = vmatprep.subr.mxu0 0.0
          %696 = vmatpush1.msra.mxu0 0.0
          %697 = vmatprep.subr.mxu0 0.0
          %698 = vmatpush1.msra.mxu0 0.0
          %699 = vmatprep.subr.mxu0 0.0
          %700 = vmatpush1.msra.mxu0 0.0
          %701 = vmatprep.subr.mxu0 0.0
          %702 = vmatpush1.msra.mxu0 0.0
          %703 = vmatprep.subr.mxu0 0.0
          %704 = vmatpush1.msra.mxu0 0.0
          %705 = vmatprep.subr.mxu0 0.0
          %706 = vmatpush1.msra.mxu0 0.0
          %707 = vmatprep.subr.mxu0 0.0
          %708 = vmatpush1.msra.mxu0 0.0
          %709 = vmatprep.subr.mxu0 0.0
          %710 = vmatpush1.msra.mxu0 0.0
          %711 = vmatprep.subr.mxu0 0.0
          %712 = vmatpush1.msra.mxu0 0.0
          %713 = vmatprep.subr.mxu0 0.0
          %714 = vmatpush1.msra.mxu0 0.0
          %715 = vmatprep.subr.mxu0 0.0
          %716 = vmatpush1.msra.mxu0 0.0
          %717 = vmatprep.subr.mxu0 0.0
          %718 = vmatpush1.msra.mxu0 0.0
          %719 = vmatprep.subr.mxu0 0.0
          %720 = vmatpush1.msra.mxu0 0.0
          %721 = vmatprep.subr.mxu0 0.0
          %722 = vmatpush1.msra.mxu0 0.0
          %723 = vmatprep.subr.mxu0 0.0
          %724 = vmatpush1.msra.mxu0 0.0
          %725 = vmatprep.subr.mxu0 0.0
          %726 = vmatpush1.msra.mxu0 0.0
          %727 = vmatprep.subr.mxu0 0.0
          %728 = vmatpush1.msra.mxu0 0.0
          %729 = vmatprep.subr.mxu0 0.0
          %730 = vmatpush1.msra.mxu0 0.0
          %731 = vmatprep.subr.mxu0 0.0
          %732 = vmatpush1.msra.mxu0 0.0
          %733 = vmatprep.subr.mxu0 0.0
          %734 = vmatpush1.msra.mxu0 0.0
          %735 = vmatprep.subr.mxu0 0.0
          %736 = vmatpush1.msra.mxu0 0.0
          %737 = vmatprep.subr.mxu0 0.0
          %738 = vmatpush1.msra.mxu0 0.0
          %739 = vmatprep.subr.mxu0 0.0
          %740 = vmatpush1.msra.mxu0 0.0
          %741 = vmatprep.mubr.f32.mxu0 0.0
          %742 = vmatmul.mubr.f32.gmra.mrb[0].mxu0 %v630
          %v743 = vpop.f32.mrb[0].mxu0
          %v744 = vadd.f32 0.0, %v743
          %v745 = vpop.f32.mrb[0].mxu0
          %746 = vmatprep.mubr.f32.mxu0 0.0
          %747 = vmatmul.mubr.f32.gmra.mrb[0].mxu0 %v633
          %v748 = vpop.f32.mrb[0].mxu0
          %v749 = vadd.f32 0.0, %v748
          %v750 = vpop.f32.mrb[0].mxu0
          %751 = vmatprep.mubr.f32.mxu0 0.0
          %752 = vmatmul.mubr.f32.gmra.mrb[0].mxu0 %v636
          %v753 = vpop.f32.mrb[0].mxu0
          %v754 = vadd.f32 0.0, %v753
          %v755 = vpop.f32.mrb[0].mxu0
          %756 = vmatprep.mubr.f32.mxu0 0.0
          %757 = vmatmul.mubr.f32.gmra.mrb[0].mxu0 %v639
          %v758 = vpop.f32.mrb[0].mxu0
          %v759 = vadd.f32 0.0, %v758
          %v760 = vpop.f32.mrb[0].mxu0
          %761 = vmatprep.mubr.f32.mxu0 0.0
          %762 = vmatmul.mubr.f32.gmra.mrb[0].mxu0 %v642
          %v763 = vpop.f32.mrb[0].mxu0
          %v764 = vadd.f32 0.0, %v763
          %v765 = vpop.f32.mrb[0].mxu0
          %766 = vmatprep.mubr.f32.mxu0 0.0
          %767 = vmatmul.mubr.f32.gmra.mrb[0].mxu0 %v645
          %v768 = vpop.f32.mrb[0].mxu0
          %v769 = vadd.f32 0.0, %v768
          %v770 = vpop.f32.mrb[0].mxu0
          %771 = vmatprep.mubr.f32.mxu0 0.0
          %772 = vmatmul.mubr.f32.gmra.mrb[0].mxu0 %v648
          %v773 = vpop.f32.mrb[0].mxu0
          %v774 = vadd.f32 0.0, %v773
          %v775 = vpop.f32.mrb[0].mxu0
          %776 = vmatprep.mubr.f32.mxu0 0.0
          %777 = vmatmul.mubr.f32.gmra.mrb[0].mxu0 %v651
          %v778 = vpop.f32.mrb[0].mxu0
          %v779 = vadd.f32 0.0, %v778
          %v780 = vpop.f32.mrb[0].mxu0
          %781 = vmatprep.mubr.f32.mxu0 0.0
          %782 = vmatmul.mubr.f32.gmra.mrb[0].mxu0 %v654
          %v783 = vpop.f32.mrb[0].mxu0
          %v784 = vadd.f32 0.0, %v783
          %v785 = vpop.f32.mrb[0].mxu0
          %786 = vmatprep.mubr.f32.mxu0 0.0
          %787 = vmatmul.mubr.f32.gmra.mrb[0].mxu0 %v657
          %v788 = vpop.f32.mrb[0].mxu0
          %v789 = vadd.f32 0.0, %v788
          %v790 = vpop.f32.mrb[0].mxu0
          %791 = vmatprep.mubr.f32.mxu0 0.0
          %792 = vmatmul.mubr.f32.gmra.mrb[0].mxu0 %v660
          %v793 = vpop.f32.mrb[0].mxu0
          %v794 = vadd.f32 0.0, %v793
          %v795 = vpop.f32.mrb[0].mxu0
          %796 = vmatprep.mubr.f32.mxu0 0.0
          %797 = vmatmul.mubr.f32.gmra.mrb[0].mxu0 %v663
          %v798 = vpop.f32.mrb[0].mxu0
          %v799 = vadd.f32 0.0, %v798
          %v800 = vpop.f32.mrb[0].mxu0
          %801 = vmatprep.mubr.f32.mxu0 0.0
          %802 = vmatmul.mubr.f32.gmra.mrb[0].mxu0 %v666
          %v803 = vpop.f32.mrb[0].mxu0
          %v804 = vadd.f32 0.0, %v803
          %v805 = vpop.f32.mrb[0].mxu0
          %806 = vmatprep.mubr.f32.mxu0 0.0
          %807 = vmatmul.mubr.f32.gmra.mrb[0].mxu0 %v669
          %v808 = vpop.f32.mrb[0].mxu0
          %v809 = vadd.f32 0.0, %v808
          %v810 = vpop.f32.mrb[0].mxu0
          %811 = vmatprep.mubr.f32.mxu0 0.0
          %812 = vmatmul.mubr.f32.gmra.mrb[0].mxu0 %v672
          %v813 = vpop.f32.mrb[0].mxu0
          %v814 = vadd.f32 0.0, %v813
          %v815 = vpop.f32.mrb[0].mxu0
          %816 = vmatprep.mubr.f32.mxu0 0.0
          %817 = vmatmul.mubr.f32.gmra.mrb[0].mxu0 %v675
          %v818 = vpop.f32.mrb[0].mxu0
          %v819 = vadd.f32 0.0, %v818
          %v820 = vpop.f32.mrb[0].mxu0
          %821 = vdwg.mxu0
          %v822 = vmax.f32 %v744, 0.0
          %v823 = vmax.f32 %v749, 0.0
          %v824 = vmax.f32 %v754, 0.0
          %v825 = vmax.f32 %v759, 0.0
          %v826 = vmax.f32 %v764, 0.0
          %v827 = vmax.f32 %v769, 0.0
          %v828 = vmax.f32 %v774, 0.0
          %v829 = vmax.f32 %v779, 0.0
          %v830 = vmax.f32 %v784, 0.0
          %v831 = vmax.f32 %v789, 0.0
          %v832 = vmax.f32 %v794, 0.0
          %v833 = vmax.f32 %v799, 0.0
          %v834 = vmax.f32 %v804, 0.0
          %v835 = vmax.f32 %v809, 0.0
          %v836 = vmax.f32 %v814, 0.0
          %v837 = vmax.f32 %v819, 0.0
          %838 = vst [vmem:[%s209] sm:$0xff] %v822
          %839 = vst [vmem:[%s209 + $0x8] sm:$0xff] %v823
          %840 = vst [vmem:[%s209 + $0x10] sm:$0xff] %v824
          %841 = vst [vmem:[%s209 + $0x18] sm:$0xff] %v825
          %842 = vst [vmem:[%s209 + $0x20] sm:$0xff] %v826
          %843 = vst [vmem:[%s209 + $0x28] sm:$0xff] %v827
          %844 = vst [vmem:[%s209 + $0x30] sm:$0xff] %v828
          %845 = vst [vmem:[%s209 + $0x38] sm:$0xff] %v829
          %846 = vst [vmem:[%s209 + $0x40] sm:$0xff] %v830
          %847 = vst [vmem:[%s209 + $0x48] sm:$0xff] %v831
          %848 = vst [vmem:[%s209 + $0x50] sm:$0xff] %v832
          %849 = vst [vmem:[%s209 + $0x58] sm:$0xff] %v833
          %850 = vst [vmem:[%s209 + $0x60] sm:$0xff] %v834
          %851 = vst [vmem:[%s209 + $0x68] sm:$0xff] %v835
          %852 = vst [vmem:[%s209 + $0x70] sm:$0xff] %v836
          %853 = vst [vmem:[%s209 + $0x78] sm:$0xff] %v837
        $region44: #{gcn_kipf_forward.1} parent=31 // pred_fallthru
          _
        %s854 = smul.u32 16, %s21
        %p855 = scmp.lt.s32.totalorder %s854, 63
        %s856 = scalar_select %p855, %s854, 63
        %s857 = smul.addr %s856, 8
        %s858 = scalar_lea.vmem %s3, %s857
        // Predicated region
        $region45: #{gcn_kipf_forward.1} parent=31 // pred_check
          %p859 = pneg %p117
        $region46: #{gcn_kipf_forward.1} parent=31 // pred_check_branch
          %861 = sbr.rel (%p859) target = $region48
        $region47: #{gcn_kipf_forward.1} parent=31 // pred_region
          %s862 = smul.u32 16, %s21
        $region48: #{gcn_kipf_forward.1} parent=31 // pred_fallthru
          _
      $region32: #{gcn_kipf_forward.1} parent=5 // pred_fallthru
        _
      %p863 = scmp.le.s32.totalorder 2, %s12
      // Predicated region
      $region49: #{gcn_kipf_forward.1} parent=5 // pred_check
        %p864 = pneg %p863
      $region50: #{gcn_kipf_forward.1} parent=5 // pred_check_branch
        %866 = sbr.rel (%p864) target = $region52
      $region51: #{gcn_kipf_forward.1} parent=5 // pred_region
        %s867 = ssub.s32 %s12, 2
        // Predicated region
        $region53: #{gcn_kipf_forward.1} parent=51 // pred_check
          %p868 = pneg %p123
        $region54: #{gcn_kipf_forward.1} parent=51 // pred_check_branch
          %870 = sbr.rel (%p868) target = $region56
        $region55: #{gcn_kipf_forward.1} parent=51 // pred_region
          %s871 = smul.u32 16, %s23
          %p872 = scmp.lt.s32.totalorder %s871, 63
          %s873 = scalar_select %p872, %s871, 63
          %s874 = smul.addr %s873, 8
          %s875 = scalar_lea.vmem %s3, %s874
        $region56: #{gcn_kipf_forward.1} parent=51 // pred_fallthru
          _
      $region52: #{gcn_kipf_forward.1} parent=5 // pred_fallthru
        _
    $region6: #{gcn_kipf_forward.1} parent=1 // loop_footer
      %s16 = sadd.s32 1, %s12
    $region7: #{gcn_kipf_forward.1} parent=1 // loop_footer_branch
      %11 = sbr.rel target = $region3
    $region8: #{gcn_kipf_forward.1} parent=1 // loop_exit
      _
    %876 = vsyncpa [#allocation4], 1
    %s877 = scalar_lea.sflag [#allocation4], 1
    %878 = vsyncpa %s877, 1

</llo_original>
